<compile_context>
chip_gen: v7x
topology: tpu7x:2x2x1
jax: 0.10.0
libtpu: 0.0.40
codegen_flags: <defaults>
</compile_context>

<pallas_src>
import jax
import jax.numpy as jnp
from jax.experimental import pallas as pl
from jax.experimental.pallas import tpu as pltpu


def _round_up(x, m):
    return ((x + m - 1) // m) * m


def _vmem_capacity_bytes():
    # Conservative default (v7x per-TC VMEM) if the query is unavailable.
    try:
        return int(pltpu.get_tpu_info().vmem_capacity_bytes)
    except Exception:
        return 64 << 20


def _embed_matmul_kernel(x_ref, w_ref, b_ref, o_ref):
    # x_ref: (TM, K) native dtype   w_ref: (K, TN) bf16
    # b_ref: (1, TN) f32            o_ref: (TM, TN) out dtype
    x = x_ref[...]
    if x.dtype != w_ref.dtype:
        x = x.astype(w_ref.dtype)      # in-kernel cast: no extra HBM pass over x
    acc = jnp.dot(x, w_ref[...], preferred_element_type=jnp.float32)
    o_ref[...] = (acc + b_ref[...]).astype(o_ref.dtype)


def img_embed(x, weight, bias, num_patches_w, num_patches_h, *, out_dtype=None):
    """ConvTranspose2d(embed_dim, in_chans, kernel_size=P, stride=P) forward.

    x:      (B, S, E)    patch tokens (module input layout), S = H*W
    weight: (E, C, P, P) PyTorch ConvTranspose2d weight layout
    bias:   (C,)
    returns (B, C, H*P, W*P) NCHW image (module output layout)
    """
    B, S, E = x.shape
    E2, C, P, P2 = weight.shape
    assert E == E2 and P == P2
    H, W = num_patches_h, num_patches_w
    assert S == H * W

    M, K, N = B * S, E, C * P * P
    out_dtype = x.dtype if out_dtype is None else jnp.dtype(out_dtype)

    # ---- flatten (token-major input -> no transpose, no pad/cast pass over x) ----
    x_flat = x.reshape(M, K)

    # Weight / bias prep is tiny (K*N elements) and happens once per call:
    # bf16 weight (MXU-native), f32 bias broadcast over the P*P columns,
    # columns zero-padded to a multiple of 256 lanes (unmasked stores, full
    # 256-wide MXU pass on v6e/v7x, still a 128-multiple for v5e).
    LANE_ALIGN = 256
    N_pad = _round_up(N, LANE_ALIGN)
    w_flat = weight.reshape(K, N).astype(jnp.bfloat16)          # columns ordered (c, p, q)
    b_flat = jnp.repeat(bias.astype(jnp.float32), P * P).reshape(1, N)
    if N_pad != N:
        w_flat = jnp.pad(w_flat, ((0, 0), (0, N_pad - N)))
        b_flat = jnp.pad(b_flat, ((0, 0), (0, N_pad - N)))

    xb = jnp.dtype(x_flat.dtype).itemsize
    ob = jnp.dtype(out_dtype).itemsize

    # ---- generation-aware VMEM budgeting ----
    vmem_cap = _vmem_capacity_bytes()
    budget = min(int(vmem_cap * 0.45), 96 << 20)   # ~29 MiB on v7x, ~58 MiB on v5e/v6e

    # Resident weight (double-buffered bf16 tile + bias) if it fits comfortably.
    if 2 * K * N_pad * 2 + 2 * N_pad * 4 <= budget // 2:
        TN = N_pad
    else:
        # Fallback: stream (K, TN) weight tiles along an inner N grid axis.
        TN = min(2048, N_pad)
        while TN > 256 and 2 * K * TN * 2 > budget // 2:
            TN -= 256
        n_blocks = int(pl.cdiv(N_pad, TN))
        TN = _round_up(int(pl.cdiv(N_pad, n_blocks)), LANE_ALIGN)
        new_n_pad = _round_up(N, TN)
        if new_n_pad != w_flat.shape[1]:
            extra = new_n_pad - w_flat.shape[1]
            w_flat = jnp.pad(w_flat, ((0, 0), (0, extra)))
            b_flat = jnp.pad(b_flat, ((0, 0), (0, extra)))
        N_pad = new_n_pad

    # TM: as large as the budget allows (double-buffered x/out tiles + f32
    # accumulator), capped at 1024, balanced so the ragged last tile is small,
    # and >= 2 tiles so the "parallel" M axis can shard across v7x's 2 TCs.
    fixed = 2 * K * TN * 2 + 2 * TN * 4
    per_row = 2 * K * xb + 2 * TN * ob + TN * 4
    tm_cap = max(8, ((budget - fixed) // per_row) // 8 * 8)
    tm_cap = min(tm_cap, 1024)
    min_m_tiles = 2 if M >= 16 else 1
    n_m_tiles = max(int(pl.cdiv(M, tm_cap)), min_m_tiles)
    TM = max(8, _round_up(int(pl.cdiv(M, n_m_tiles)), 8))
    grid_m = int(pl.cdiv(M, TM))        # ragged last M tile handled by Pallas

    vmem_need = fixed + TM * per_row
    vmem_limit = int(min(max(vmem_need + (8 << 20), 32 << 20), vmem_cap - (2 << 20)))

    cost = pl.CostEstimate(
        flops=2 * M * K * N_pad,
        transcendentals=0,
        bytes_accessed=M * K * xb + K * N_pad * 2 + N_pad * 4 + M * N_pad * ob)

    if TN == N_pad:
        # 1-D grid over M; weight/bias blocks are constant -> DMA'd once, stay resident.
        grid = (grid_m,)
        in_specs = [
            pl.BlockSpec((TM, K), lambda i: (i, 0)),
            pl.BlockSpec((K, TN), lambda i: (0, 0)),
            pl.BlockSpec((1, TN), lambda i: (0, 0)),
        ]
        out_specs = pl.BlockSpec((TM, TN), lambda i: (i, 0))
        dims = ("parallel",)
    else:
        # 2-D grid, N innermost so the x tile stays resident while weight tiles stream.
        grid = (grid_m, N_pad // TN)
        in_specs = [
            pl.BlockSpec((TM, K), lambda i, j: (i, 0)),
            pl.BlockSpec((K, TN), lambda i, j: (0, j)),
            pl.BlockSpec((1, TN), lambda i, j: (0, j)),
        ]
        out_specs = pl.BlockSpec((TM, TN), lambda i, j: (i, j))
        dims = ("parallel", "parallel")

    out_flat = pl.pallas_call(
        _embed_matmul_kernel,
        out_shape=jax.ShapeDtypeStruct((M, N_pad), out_dtype),
        grid_spec=pltpu.PrefetchScalarGridSpec(
            num_scalar_prefetch=0,
            grid=grid,
            in_specs=in_specs,
            out_specs=out_specs),
        compiler_params=pltpu.CompilerParams(
            dimension_semantics=dims,
            vmem_limit_bytes=vmem_limit),
        cost_estimate=cost,
    )(x_flat, w_flat, b_flat)

    # ---- depth-to-space epilogue: assemble non-overlapping P x P blocks into NCHW ----
    out = out_flat[:, :N] if N_pad != N else out_flat
    y = out.reshape(B, H, W, C, P, P)
    y = jnp.transpose(y, (0, 3, 1, 4, 2, 5))          # (B, C, H, P, W, P)
    return y.reshape(B, C, H * P, W * P)


if __name__ == "__main__":
    # Small shapes consistent with the module (scaled down).
    patch_size = 8
    in_chans = 4
    embed_dim = 32
    B, H, W = 2, 4, 4
    S = H * W

    key = jax.random.PRNGKey(0)
    kx, kw, kb = jax.random.split(key, 3)
    x = jax.random.normal(kx, (B, S, embed_dim), dtype=jnp.float32)
    weight = jax.random.normal(
        kw, (embed_dim, in_chans, patch_size, patch_size), dtype=jnp.float32) * 0.02
    bias = jax.random.normal(kb, (in_chans,), dtype=jnp.float32) * 0.02

    y = img_embed(x, weight, bias, W, H)
    y = jax.block_until_ready(y)

    def assemble(blocks):
        # blocks: (B, S, C, P, P) -> (B, C, H*P, W*P)
        b6 = blocks.reshape(B, H, W, in_chans, patch_size, patch_size)
        return jnp.transpose(b6, (0, 3, 1, 4, 2, 5)).reshape(
            B, in_chans, H * patch_size, W * patch_size)

    # Reference 1: same bf16-rounded operands, f32 math (tight check of the kernel).
    xr = x.astype(jnp.bfloat16).astype(jnp.float32)
    wr = weight.astype(jnp.bfloat16).astype(jnp.float32)
    ref_bf = assemble(
        jnp.einsum("bse,ecpq->bscpq", xr, wr,
                   precision=jax.lax.Precision.HIGHEST)
        + bias[None, None, :, None, None])

    # Reference 2: full-precision ConvTranspose semantics (loose check).
    ref_f32 = assemble(
        jnp.einsum("bse,ecpq->bscpq", x, weight,
                   precision=jax.lax.Precision.HIGHEST)
        + bias[None, None, :, None, None])

    assert y.shape == (B, in_chans, H * patch_size, W * patch_size)
    assert jnp.allclose(y, ref_bf, atol=1e-4, rtol=1e-4)
    assert jnp.allclose(y, ref_f32, atol=2e-2, rtol=2e-2)
    print("KERNEL_OK")
</pallas_src>

<mosaic_0001>
module attributes {stable_mosaic.version = 11 : i64} {
  func.func @_embed_matmul_kernel(%arg0: i32, %arg1: memref<16x32xf32, #tpu.memory_space<vmem>>, %arg2: memref<32x256xbf16, #tpu.memory_space<vmem>>, %arg3: memref<1x256xf32, #tpu.memory_space<vmem>>, %arg4: memref<16x256xf32, #tpu.memory_space<vmem>>) attributes {dimension_semantics = [#tpu.dimension_semantics<parallel>], iteration_bounds = array<i64: 2>, scalar_prefetch = 0 : i64, scratch_operands = 0 : i64, tpu.core_type = #tpu.core_type<tc>, window_params = [{transform_indices = @transform_0, window_bounds = array<i64: 16, 32>}, {pipeline_mode = #tpu.pipeline_mode<synchronous>, transform_indices = @transform_1, window_bounds = array<i64: 32, 256>}, {pipeline_mode = #tpu.pipeline_mode<synchronous>, transform_indices = @transform_2, window_bounds = array<i64: 1, 256>}, {transform_indices = @transform_3, window_bounds = array<i64: 16, 256>}]} {
    %c0 = arith.constant 0 : index
    %c0_0 = arith.constant 0 : index
    %0 = vector.load %arg1[%c0, %c0_0] : memref<16x32xf32, #tpu.memory_space<vmem>>, vector<16x32xf32>
    %1 = arith.truncf %0 : vector<16x32xf32> to vector<16x32xbf16>
    %c0_1 = arith.constant 0 : index
    %c0_2 = arith.constant 0 : index
    %2 = vector.load %arg2[%c0_1, %c0_2] : memref<32x256xbf16, #tpu.memory_space<vmem>>, vector<32x256xbf16>
    %cst = arith.constant dense<0.000000e+00> : vector<16x256xf32>
    %3 = tpu.matmul %1, %2, %cst {dimension_numbers = #tpu.dot_dimension_numbers<[1], [0], [0], [1], [0, 0, 1, 1], [], []>} : vector<16x32xbf16>, vector<32x256xbf16>, vector<16x256xf32> -> vector<16x256xf32>
    %c0_3 = arith.constant 0 : index
    %c0_4 = arith.constant 0 : index
    %4 = vector.load %arg3[%c0_3, %c0_4] : memref<1x256xf32, #tpu.memory_space<vmem>>, vector<1x256xf32>
    %5 = vector.broadcast %4 : vector<1x256xf32> to vector<16x256xf32>
    %6 = arith.addf %3, %5 : vector<16x256xf32>
    %c0_5 = arith.constant 0 : index
    %c0_6 = arith.constant 0 : index
    %7 = vector.load %arg4[%c0_5, %c0_6] : memref<16x256xf32, #tpu.memory_space<vmem>>, vector<16x256xf32>
    tpu.vector_store %arg4[%c0_5, %c0_6], %6 {strides = array<i32>} : memref<16x256xf32, #tpu.memory_space<vmem>>, vector<16x256xf32>,
    return
  }
  func.func @transform_0(%arg0: i32) -> (i32, i32) {
    %c0_i32 = arith.constant 0 : i32
    %c0_i32_0 = arith.constant 0 : i32
    return %arg0, %c0_i32 : i32, i32
  }
  func.func @transform_1(%arg0: i32) -> (i32, i32) {
    %c0_i32 = arith.constant 0 : i32
    %c0_i32_0 = arith.constant 0 : i32
    %c0_i32_1 = arith.constant 0 : i32
    return %c0_i32, %c0_i32_0 : i32, i32
  }
  func.func @transform_2(%arg0: i32) -> (i32, i32) {
    %c0_i32 = arith.constant 0 : i32
    %c0_i32_0 = arith.constant 0 : i32
    %c0_i32_1 = arith.constant 0 : i32
    return %c0_i32, %c0_i32_0 : i32, i32
  }
  func.func @transform_3(%arg0: i32) -> (i32, i32) {
    %c0_i32 = arith.constant 0 : i32
    %c0_i32_0 = arith.constant 0 : i32
    return %arg0, %c0_i32 : i32, i32
  }
}

</mosaic_0001>

<llo_original>
// kernel: tpu_custom_call.1
$region0: #{tpu_custom_call.1}
  #allocation0 [shape = 'u32[]', space=smem, size = 0x4, offset = 0x4, fixed_abs, tag = 'smem constant byte address 0x4 - core index']
  #allocation1 [shape = 'u32[144,128]{1,0:T(1,128)}', space=vmem, size = 0x12000, scoped, tag = 'internal scratch']
  %s0 = inlined_call_operand.hbm [shape: f32[32,32], index: 0, kind: input, shape index: {}]
  %s1 = inlined_call_operand.hbm [shape: bf16[32,256], index: 1, kind: input, shape index: {}]
  %s2 = inlined_call_operand.vmem [shape: f32[1,256], index: 2, kind: input, shape index: {}]
  %s3 = inlined_call_operand.hbm [shape: f32[32,256], index: 3, kind: output, shape index: {}]
  %s4 = sld [smem:[#allocation0]]
  $region53: #{tpu_custom_call.1} parent=0
    _
  %s6 = ssub.s32 1, %s4
  %s7 = scalar_select 0, %s6, %s4
  $region1: #{tpu_custom_call.1} parent=0
    #allocation2 [shape = 'u8[16384]{0}', space=vmem, size = 0x4000, scoped, tag = 'input window, operand 0']
    #allocation3 [shape = 's32[2]{0}', space=sflag, size = 0x8, scoped, tag = 'scoped memory for tpu_custom_call.1']
    #allocation4 [shape = 's32[2]{0}', space=sflag, size = 0x8, scoped, tag = 'scoped memory for tpu_custom_call.1']
    #allocation5 [shape = 'u8[16384]{0}', space=vmem, size = 0x4000, scoped, tag = 'input window, operand 1, single buffered']
    #allocation6 [shape = 's32[1]{0}', space=sflag, size = 0x4, scoped, tag = 'scoped memory for tpu_custom_call.1']
    #allocation7 [shape = 'u8[32768]{0}', space=vmem, size = 0x8000, scoped, tag = 'output window, operand 0']
    %8 = vsyncpa [#allocation3], 0
    %s9 = scalar_lea.sflag [#allocation3], 1
    %10 = vsyncpa %s9, 0
    %11 = vsyncpa [#allocation6], 0
    %12 = vsyncpa [#allocation4], 0
    %s13 = scalar_lea.sflag [#allocation4], 1
    %14 = vsyncpa %s13, 0
    loop: start=0, step=1, limit=4
    $region2: #{tpu_custom_call.1} parent=1 // loop_pre_header
      _
    $region3: #{tpu_custom_call.1} parent=1 // loop_header
      %s16 = sphi 0, %s20
      %p17 = scmp.ge.s32.totalorder %s16, 4
      %s26 = sphi 0, %s28
      %s29 = sphi 0, %s26
      %s30 = sphi 0, %s29
      %s46 = sphi 0, %s30
      %s50 = sphi 0, %s50
      %s52 = sphi 0, %s50
      %s53 = sphi 0, %s52
      %s67 = sphi 0, %s53
      %s71 = sphi 0, %s71
      %s73 = sphi 0, %s71
      %s74 = sphi 0, %s73
      %s88 = sphi 0, %s74
      %s94 = sphi 0, %s96
      %s97 = sphi 0, %s94
      %s98 = sphi 0, %s97
      %s114 = sphi 0, %s98
    $region4: #{tpu_custom_call.1} parent=1 // loop_header_branch
      %19 = sbr.rel (%p17) target = $region8
    $region5: #{tpu_custom_call.1} parent=1 // loop_body
      %s21 = ssub.s32 %s16, 1
      %s22 = ssub.s32 %s16, 2
      %s23 = sadd.s32 %s16, 1
      %s24 = ssub.s32 %s16, %s23
      %p25 = scmp.eq.s32.totalorder %s24, 0
      %s27 = sadd.s32 %s26, 1
      %s28 = scalar_select %p25, %s26, %s27
      %p31 = pneg %p25
      %p32 = scmp.eq.s32.totalorder %s16, 1
      %p33 = por %p31, %p32
      %p34 = scmp.ne.s32.totalorder %s26, %s29
      %p35 = scmp.eq.s32.totalorder %s16, 0
      %p36 = por %p34, %p35
      %p37 = scmp.ne.s32.totalorder %s26, %s29
      %p38 = scmp.eq.s32.totalorder %s21, 1
      %p39 = por %p37, %p38
      %p40 = scmp.ne.s32.totalorder %s29, %s30
      %p41 = scmp.eq.s32.totalorder %s21, 0
      %p42 = por %p40, %p41
      %p43 = scmp.ne.s32.totalorder %s29, %s30
      %p44 = scmp.eq.s32.totalorder %s22, 1
      %p45 = por %p43, %p44
      %p47 = scmp.ne.s32.totalorder %s30, %s46
      %p48 = scmp.eq.s32.totalorder %s22, 0
      %p49 = por %p47, %p48
      %s51 = sadd.s32 %s50, 1
      %p54 = scmp.eq.s32.totalorder %s16, 1
      %p55 = scmp.ne.s32.totalorder %s50, %s52
      %p56 = scmp.eq.s32.totalorder %s16, 0
      %p57 = por %p55, %p56
      %p58 = scmp.ne.s32.totalorder %s50, %s52
      %p59 = scmp.eq.s32.totalorder %s21, 1
      %p60 = por %p58, %p59
      %p61 = scmp.ne.s32.totalorder %s52, %s53
      %p62 = scmp.eq.s32.totalorder %s21, 0
      %p63 = por %p61, %p62
      %p64 = scmp.ne.s32.totalorder %s52, %s53
      %p65 = scmp.eq.s32.totalorder %s22, 1
      %p66 = por %p64, %p65
      %p68 = scmp.ne.s32.totalorder %s53, %s67
      %p69 = scmp.eq.s32.totalorder %s22, 0
      %p70 = por %p68, %p69
      %s72 = sadd.s32 %s71, 1
      %p75 = scmp.eq.s32.totalorder %s16, 1
      %p76 = scmp.ne.s32.totalorder %s71, %s73
      %p77 = scmp.eq.s32.totalorder %s16, 0
      %p78 = por %p76, %p77
      %p79 = scmp.ne.s32.totalorder %s71, %s73
      %p80 = scmp.eq.s32.totalorder %s21, 1
      %p81 = por %p79, %p80
      %p82 = scmp.ne.s32.totalorder %s73, %s74
      %p83 = scmp.eq.s32.totalorder %s21, 0
      %p84 = por %p82, %p83
      %p85 = scmp.ne.s32.totalorder %s73, %s74
      %p86 = scmp.eq.s32.totalorder %s22, 1
      %p87 = por %p85, %p86
      %p89 = scmp.ne.s32.totalorder %s74, %s88
      %p90 = scmp.eq.s32.totalorder %s22, 0
      %p91 = por %p89, %p90
      %s92 = ssub.s32 %s16, %s23
      %p93 = scmp.eq.s32.totalorder %s92, 0
      %s95 = sadd.s32 %s94, 1
      %s96 = scalar_select %p93, %s94, %s95
      %p99 = pneg %p93
      %p100 = scmp.eq.s32.totalorder %s16, 1
      %p101 = por %p99, %p100
      %p102 = scmp.ne.s32.totalorder %s94, %s97
      %p103 = scmp.eq.s32.totalorder %s16, 0
      %p104 = por %p102, %p103
      %p105 = scmp.ne.s32.totalorder %s94, %s97
      %p106 = scmp.eq.s32.totalorder %s21, 1
      %p107 = por %p105, %p106
      %p108 = scmp.ne.s32.totalorder %s97, %s98
      %p109 = scmp.eq.s32.totalorder %s21, 0
      %p110 = por %p108, %p109
      %p111 = scmp.ne.s32.totalorder %s97, %s98
      %p112 = scmp.eq.s32.totalorder %s22, 1
      %p113 = por %p111, %p112
      %p115 = scmp.ne.s32.totalorder %s98, %s114
      %p116 = scmp.eq.s32.totalorder %s22, 0
      %p117 = por %p115, %p116
      %p118 = scmp.le.s32.totalorder 1, %s16
      %p119 = scmp.lt.s32.totalorder %s16, 3
      %p120 = pnand %p118, %p119
      %p121 = pneg %p120
      // Predicated region
      $region9: #{tpu_custom_call.1} parent=5 // pred_check
        _
      $region10: #{tpu_custom_call.1} parent=5 // pred_check_branch
        %123 = sbr.rel (%p120) target = $region12
      $region11: #{tpu_custom_call.1} parent=5 // pred_region
        %s124 = ssub.s32 %s16, 1
        // Predicated region
        $region13: #{tpu_custom_call.1} parent=11 // pred_check
          %p125 = pneg %p63
        $region14: #{tpu_custom_call.1} parent=11 // pred_check_branch
          %127 = sbr.rel (%p125) target = $region16
        $region15: #{tpu_custom_call.1} parent=11 // pred_region
          %s129 = ssub.s32 512, 512
          %130 = vsyncadd [#allocation6], %s129
          %s131 = sshll.u32 [#allocation5], 4
          %s132 = int_to_ptr.vmem [resolvable:$true] %s131
          %137 = dma.hbm_to_vmem [thread:$0]  %s1, 512, %s132, [#allocation6], 128, 128, 8
        $region16: #{tpu_custom_call.1} parent=11 // pred_fallthru
          _
        // Predicated region
        $region17: #{tpu_custom_call.1} parent=11 // pred_check
          %p138 = pneg %p84
        $region18: #{tpu_custom_call.1} parent=11 // pred_check_branch
          %140 = sbr.rel (%p138) target = $region20
        $region19: #{tpu_custom_call.1} parent=11 // pred_region
          _
        $region20: #{tpu_custom_call.1} parent=11 // pred_fallthru
          _
      $region12: #{tpu_custom_call.1} parent=5 // pred_fallthru
        _
      %p141 = scmp.lt.s32.totalorder %s16, 2
      // Predicated region
      $region21: #{tpu_custom_call.1} parent=5 // pred_check
        %p142 = pneg %p141
      $region22: #{tpu_custom_call.1} parent=5 // pred_check_branch
        %144 = sbr.rel (%p142) target = $region24
      $region23: #{tpu_custom_call.1} parent=5 // pred_region
        // Predicated region
        $region25: #{tpu_custom_call.1} parent=23 // pred_check
          %p145 = pneg %p36
        $region26: #{tpu_custom_call.1} parent=23 // pred_check_branch
          %147 = sbr.rel (%p145) target = $region28
        $region27: #{tpu_custom_call.1} parent=23 // pred_region
          %s148 = sand.u32 %s26, 1
          %s149 = scalar_lea.sflag [#allocation3], %s148
          %s150 = sand.u32 %s26, 1
          %s151 = smul.addr %s150, 16
          %s152 = scalar_lea.vmem [#allocation2], %s151
          %s153 = smul.u32 2, %s16
          %s155 = ssub.s32 256, 256
          %156 = vsyncadd %s149, %s155
          %s157 = smul.addr %s153, 128
          %s158 = scalar_lea.hbm %s0, %s157
          %s159 = sshll.u32 %s152, 4
          %s160 = int_to_ptr.vmem [resolvable:$true] %s159
          %165 = dma.hbm_to_vmem [thread:$0]  %s158, 256, %s160, %s149, 128, 128, 8
        $region28: #{tpu_custom_call.1} parent=23 // pred_fallthru
          _
      $region24: #{tpu_custom_call.1} parent=5 // pred_fallthru
        _
      %p166 = scmp.le.s32.totalorder 1, %s16
      %p167 = scmp.lt.s32.totalorder %s16, 3
      %p168 = pnand %p166, %p167
      %p169 = pneg %p168
      // Predicated region
      $region29: #{tpu_custom_call.1} parent=5 // pred_check
        _
      $region30: #{tpu_custom_call.1} parent=5 // pred_check_branch
        %171 = sbr.rel (%p168) target = $region32
      $region31: #{tpu_custom_call.1} parent=5 // pred_region
        %s172 = ssub.s32 %s16, 1
        %s173 = sand.u32 %s29, 1
        %s174 = scalar_lea.sflag [#allocation3], %s173
        %s175 = sand.u32 %s29, 1
        %s176 = smul.addr %s175, 16
        %s177 = scalar_lea.vmem [#allocation2], %s176
        // Predicated region
        $region33: #{tpu_custom_call.1} parent=31 // pred_check
          %p178 = pneg %p42
        $region34: #{tpu_custom_call.1} parent=31 // pred_check_branch
          %180 = sbr.rel (%p178) target = $region36
        $region35: #{tpu_custom_call.1} parent=31 // pred_region
          %181 = dma.done %s174, 256
        $region36: #{tpu_custom_call.1} parent=31 // pred_fallthru
          _
        // Predicated region
        $region37: #{tpu_custom_call.1} parent=31 // pred_check
          %p182 = pneg %p63
        $region38: #{tpu_custom_call.1} parent=31 // pred_check_branch
          %184 = sbr.rel (%p182) target = $region40
        $region39: #{tpu_custom_call.1} parent=31 // pred_region
          %185 = dma.done [#allocation6], 512
        $region40: #{tpu_custom_call.1} parent=31 // pred_fallthru
          _
        %s186 = sand.u32 %s29, 1
        %s187 = scalar_lea.sflag [#allocation3], %s186
        %s188 = sand.u32 %s29, 1
        %s189 = smul.addr %s188, 16
        %s190 = scalar_lea.vmem [#allocation2], %s189
        %p191 = pneg %p42
        %p192 = pneg %p39
        %p193 = pneg %p63
        %p194 = pneg %p60
        %p195 = pneg %p84
        %p196 = pneg %p81
        %p197 = pneg %p110
        %p198 = pneg %p107
        %s199 = sand.u32 %s97, 1
        %s200 = scalar_lea.sflag [#allocation4], %s199
        %s201 = sand.u32 %s97, 1
        %s202 = smul.addr %s201, 32
        %s203 = scalar_lea.vmem [#allocation7], %s202
        %s204 = smul.u32 2, %s21
        %s205 = smul.u32 2, %s21
        %v207 = vld [vmem:[%s177] sm:$0xff]
        %v208 = vld [vmem:[%s177 + $0x8] sm:$0xff]
        %v209 = vpack.c.bf16 %v208, %v207
        %v210 = vld [vmem:[#allocation5] sm:$0xff]
        %v211 = vld [vmem:[#allocation5 + $0x8] sm:$0xff]
        %v212 = vld [vmem:[#allocation5 + $0x10] sm:$0xff]
        %v213 = vld [vmem:[#allocation5 + $0x18] sm:$0xff]
        %v214 = vld [vmem:[%s2] sm:$0x3]
        %v216 = vlaneseq
        %v217 = vshrl.u32 %v216, 7
        %v218 = vsub.s32 0, %v217
        %v219 = vrot.slane %v214, %v218
        %v220 = vlaneseq
        %v221 = vshrl.u32 %v220, 7
        %v222 = vsub.s32 1, %v221
        %v223 = vrot.slane %v214, %v222
        %v230 = vunpack.c.l.b16 %v210
        %v231 = vunpack.c.h.b16 %v210
        %v232 = vunpack.c.l.b16 %v211
        %v233 = vunpack.c.h.b16 %v211
        %v234 = vunpack.c.l.b16 %v212
        %v235 = vunpack.c.h.b16 %v212
        %v236 = vunpack.c.l.b16 %v213
        %v237 = vunpack.c.h.b16 %v213
        %v238 = vpack.c.b16 %v232, %v230
        %v239 = vpack.c.b16 %v233, %v231
        %v240 = vpack.c.b16 %v236, %v234
        %v241 = vpack.c.b16 %v237, %v235
        %vm246 = vcmask 261120
        %v248 = vsel %vm246, %v209, 0
        %250 = vmatprep.subr.bf16.mxu0 %v239
        %251 = vmatpush1.bf16.msra.mxu0 %v238
        %252 = vmatprep.subr.bf16.mxu0 %v241
        %253 = vmatpush1.bf16.msra.mxu0 %v240
        %254 = vmatprep.subr.bf16.mxu0 0
        %255 = vmatpush1.bf16.msra.mxu0 0
        %256 = vmatprep.subr.bf16.mxu0 0
        %257 = vmatpush1.bf16.msra.mxu0 0
        %258 = vmatprep.subr.bf16.mxu0 0
        %259 = vmatpush1.bf16.msra.mxu0 0
        %260 = vmatprep.subr.bf16.mxu0 0
        %261 = vmatpush1.bf16.msra.mxu0 0
        %262 = vmatprep.subr.bf16.mxu0 0
        %263 = vmatpush1.bf16.msra.mxu0 0
        %264 = vmatprep.subr.bf16.mxu0 0
        %265 = vmatpush1.bf16.msra.mxu0 0
        %266 = vmatprep.subr.bf16.mxu0 0
        %267 = vmatpush1.bf16.msra.mxu0 0
        %268 = vmatprep.subr.bf16.mxu0 0
        %269 = vmatpush1.bf16.msra.mxu0 0
        %270 = vmatprep.subr.bf16.mxu0 0
        %271 = vmatpush1.bf16.msra.mxu0 0
        %272 = vmatprep.subr.bf16.mxu0 0
        %273 = vmatpush1.bf16.msra.mxu0 0
        %274 = vmatprep.subr.bf16.mxu0 0
        %275 = vmatpush1.bf16.msra.mxu0 0
        %276 = vmatprep.subr.bf16.mxu0 0
        %277 = vmatpush1.bf16.msra.mxu0 0
        %278 = vmatprep.subr.bf16.mxu0 0
        %279 = vmatpush1.bf16.msra.mxu0 0
        %280 = vmatprep.subr.bf16.mxu0 0
        %281 = vmatpush1.bf16.msra.mxu0 0
        %282 = vmatprep.mubr.bf16.mxu0 0
        %283 = vmatmul.mubr.bf16.gmra.mrb[0].mxu0 %v248
        %v284 = vpop.f32.mrb[0].mxu0
        %v285 = vadd.f32 %v219, %v284
        %v286 = vpop.f32.mrb[0].mxu0
        %v287 = vadd.f32 %v223, %v286
        %v288 = vpop.f32.mrb[0].mxu0
        %v289 = vadd.f32 %v219, %v288
        %v290 = vpop.f32.mrb[0].mxu0
        %v291 = vadd.f32 %v223, %v290
        %292 = vdwg.mxu0
        %293 = vst [vmem:[%s203] sm:$0xff] %v285
        %294 = vst [vmem:[%s203 + $0x8] sm:$0xff] %v287
        %295 = vst [vmem:[%s203 + $0x10] sm:$0xff] %v289
        %296 = vst [vmem:[%s203 + $0x18] sm:$0xff] %v291
        %s297 = sand.u32 %s97, 1
        %s298 = scalar_lea.sflag [#allocation4], %s297
        %s299 = sand.u32 %s97, 1
        %s300 = smul.addr %s299, 32
        %s301 = scalar_lea.vmem [#allocation7], %s300
        // Predicated region
        $region41: #{tpu_custom_call.1} parent=31 // pred_check
          %p302 = pneg %p107
        $region42: #{tpu_custom_call.1} parent=31 // pred_check_branch
          %304 = sbr.rel (%p302) target = $region44
        $region43: #{tpu_custom_call.1} parent=31 // pred_region
          %s305 = smul.u32 2, %s21
          %s307 = ssub.s32 512, 512
          %308 = vsyncadd %s298, %s307
          %s309 = smul.addr %s305, 2
          %s310 = smul.addr %s309, 128
          %s311 = scalar_lea.hbm %s3, %s310
          %s312 = sshll.u32 %s301, 4
          %s313 = int_to_ptr.vmem [resolvable:$true] %s312
          %318 = dma.vmem_to_hbm [thread:$0]  %s313, 512, %s311, %s298, 256, 256, 16
        $region44: #{tpu_custom_call.1} parent=31 // pred_fallthru
          _
      $region32: #{tpu_custom_call.1} parent=5 // pred_fallthru
        _
      %p319 = scmp.le.s32.totalorder 2, %s16
      // Predicated region
      $region45: #{tpu_custom_call.1} parent=5 // pred_check
        %p320 = pneg %p319
      $region46: #{tpu_custom_call.1} parent=5 // pred_check_branch
        %322 = sbr.rel (%p320) target = $region48
      $region47: #{tpu_custom_call.1} parent=5 // pred_region
        %s323 = ssub.s32 %s16, 2
        // Predicated region
        $region49: #{tpu_custom_call.1} parent=47 // pred_check
          %p324 = pneg %p113
        $region50: #{tpu_custom_call.1} parent=47 // pred_check_branch
          %326 = sbr.rel (%p324) target = $region52
        $region51: #{tpu_custom_call.1} parent=47 // pred_region
          %s327 = sand.u32 %s98, 1
          %s328 = scalar_lea.sflag [#allocation4], %s327
          %s329 = sand.u32 %s98, 1
          %s330 = smul.addr %s329, 32
          %s331 = scalar_lea.vmem [#allocation7], %s330
          %332 = dma.done %s328, 512
        $region52: #{tpu_custom_call.1} parent=47 // pred_fallthru
          _
      $region48: #{tpu_custom_call.1} parent=5 // pred_fallthru
        _
    $region6: #{tpu_custom_call.1} parent=1 // loop_footer
      %s20 = sadd.s32 1, %s16
    $region7: #{tpu_custom_call.1} parent=1 // loop_footer_branch
      %15 = sbr.rel target = $region3
    $region8: #{tpu_custom_call.1} parent=1 // loop_exit
      _
    %333 = vsyncpa [#allocation3], 1
    %s334 = scalar_lea.sflag [#allocation3], 1
    %335 = vsyncpa %s334, 1
    %336 = vsyncpa [#allocation6], 1
    %337 = vsyncpa [#allocation4], 1
    %s338 = scalar_lea.sflag [#allocation4], 1
    %339 = vsyncpa %s338, 1

</llo_original>
